<compile_context>
chip_gen: v5e
topology: v5e:2x2
jax: 0.10.0
libtpu: 0.0.40
codegen_flags: <defaults>
</compile_context>

<pallas_src>
import jax
import jax.numpy as jnp
from jax.experimental import pallas as pl
from jax.experimental.pallas import tpu as pltpu


def _relu_kernel(x_ref, o_ref):
    # Elementwise max(x, 0) on the whole VMEM tile (VPU).
    o_ref[...] = jnp.maximum(x_ref[...], jnp.zeros((), dtype=x_ref.dtype))


def _relu_2d(x2d: jax.Array) -> jax.Array:
    return pl.pallas_call(
        _relu_kernel,
        out_shape=jax.ShapeDtypeStruct(x2d.shape, x2d.dtype),
        # No grid: single invocation, whole array resident in VMEM.
        in_specs=[pl.BlockSpec(memory_space=pltpu.MemorySpace.VMEM)],
        out_specs=pl.BlockSpec(memory_space=pltpu.MemorySpace.VMEM),
        # In-place (matches torch ReLU(inplace=True)); caller donates the input.
        input_output_aliases={0: 0},
    )(x2d)


def relu_pallas(x: jax.Array) -> jax.Array:
    """ReLU matching torch.nn.ReLU (inplace semantics handled via aliasing)."""
    orig_shape = x.shape
    total = 1
    for d in orig_shape:
        total *= d

    if total % 128 == 0:
        # Lane-dense slab: fully packed 128-lane rows, unmasked full-width stores.
        x2d = x.reshape(total // 128, 128)
    else:
        # Fallback for shapes whose element count is not a multiple of 128.
        lead = total // orig_shape[-1]
        x2d = x.reshape(lead, orig_shape[-1])

    out2d = _relu_2d(x2d)
    return out2d.reshape(orig_shape)


# Donate the input so the in-kernel aliasing can reuse the HBM buffer.
relu_pallas_jit = jax.jit(relu_pallas, donate_argnums=(0,))


if __name__ == "__main__":
    key = jax.random.PRNGKey(0)
    # Shape implied by the module's forward: [1, 1152, 7, 7]
    x539 = jax.random.normal(key, (1, 1152, 7, 7), dtype=jnp.float32)

    # Record metadata and compute the reference BEFORE the donated call.
    in_shape = x539.shape
    in_dtype = x539.dtype
    ref = jnp.maximum(x539, 0.0)
    jax.block_until_ready(ref)

    x540 = relu_pallas_jit(x539)
    jax.block_until_ready(x540)

    # Correctness check against plain JAX reference.
    assert x540.shape == in_shape
    assert x540.dtype == in_dtype
    assert bool(jnp.array_equal(x540, ref))

    print("KERNEL_OK")
</pallas_src>

<mosaic_0001>
module attributes {stable_mosaic.version = 11 : i64} {
  func.func @_relu_kernel(%arg0: memref<441x128xf32, #tpu.memory_space<vmem>>, %arg1: memref<441x128xf32, #tpu.memory_space<vmem>>) attributes {dimension_semantics = [], scalar_prefetch = 0 : i64, scratch_operands = 0 : i64, tpu.core_type = #tpu.core_type<tc>} {
    %c0 = arith.constant 0 : index
    %c0_0 = arith.constant 0 : index
    %0 = vector.load %arg0[%c0, %c0_0] : memref<441x128xf32, #tpu.memory_space<vmem>>, vector<441x128xf32>
    %cst = arith.constant 0.000000e+00 : f32
    %1 = vector.broadcast %cst : f32 to vector<441x128xf32>
    %2 = arith.maximumf %0, %1 : vector<441x128xf32>
    %c0_1 = arith.constant 0 : index
    %c0_2 = arith.constant 0 : index
    %3 = vector.load %arg1[%c0_1, %c0_2] : memref<441x128xf32, #tpu.memory_space<vmem>>, vector<441x128xf32>
    tpu.vector_store %arg1[%c0_1, %c0_2], %2 {strides = array<i32>} : memref<441x128xf32, #tpu.memory_space<vmem>>, vector<441x128xf32>,
    return
  }
}

</mosaic_0001>

<llo_original>
// kernel: relu_pallas.1
$region0: #{relu_pallas.1}
  #allocation0 [shape = 'u32[]', space=smem, size = 0x4, offset = 0x4, fixed_abs, tag = 'smem constant byte address 0x4 - core index']
  #allocation1 [shape = 'u32[72,128]{1,0:T(1,128)}', space=vmem, size = 0x9000, scoped, tag = 'internal scratch']
  %s0 = inlined_call_operand.vmem [shape: f32[441,128], index: 0, kind: input, shape index: {}, may-alias: {0,1}]
  %s1 = inlined_call_operand.vmem [shape: f32[441,128], index: 1, kind: output, shape index: {}, may-alias: {0,1}]
  %s2 = sld [smem:[#allocation0]]
  $region14: #{relu_pallas.1} parent=0
    _
  %s4 = ssub.s32 1, %s2
  %s5 = scalar_select 0, %s4, %s2
  // Predicated region
  $region2: #{relu_pallas.1} parent=0 // pred_check
    _
  $region3: #{relu_pallas.1} parent=0 // pred_check_branch
    %7 = sbr.rel (0) target = $region5
  $region4: #{relu_pallas.1} parent=0 // pred_region
    _
  $region5: #{relu_pallas.1} parent=0 // pred_fallthru
    _
  %v8 = vld [vmem:[%s0] sm:$0xff]
  %v9 = vld [vmem:[%s0 + $0x8] sm:$0xff]
  %v10 = vld [vmem:[%s0 + $0x10] sm:$0xff]
  %v11 = vld [vmem:[%s0 + $0x18] sm:$0xff]
  %v12 = vld [vmem:[%s0 + $0x20] sm:$0xff]
  %v13 = vld [vmem:[%s0 + $0x28] sm:$0xff]
  %v14 = vld [vmem:[%s0 + $0x30] sm:$0xff]
  %v15 = vld [vmem:[%s0 + $0x38] sm:$0xff]
  %v16 = vld [vmem:[%s0 + $0x40] sm:$0xff]
  %v17 = vld [vmem:[%s0 + $0x48] sm:$0xff]
  %v18 = vld [vmem:[%s0 + $0x50] sm:$0xff]
  %v19 = vld [vmem:[%s0 + $0x58] sm:$0xff]
  %v20 = vld [vmem:[%s0 + $0x60] sm:$0xff]
  %v21 = vld [vmem:[%s0 + $0x68] sm:$0xff]
  %v22 = vld [vmem:[%s0 + $0x70] sm:$0xff]
  %v23 = vld [vmem:[%s0 + $0x78] sm:$0xff]
  %v24 = vld [vmem:[%s0 + $0x80] sm:$0xff]
  %v25 = vld [vmem:[%s0 + $0x88] sm:$0xff]
  %v26 = vld [vmem:[%s0 + $0x90] sm:$0xff]
  %v27 = vld [vmem:[%s0 + $0x98] sm:$0xff]
  %v28 = vld [vmem:[%s0 + $0xa0] sm:$0xff]
  %v29 = vld [vmem:[%s0 + $0xa8] sm:$0xff]
  %v30 = vld [vmem:[%s0 + $0xb0] sm:$0xff]
  %v31 = vld [vmem:[%s0 + $0xb8] sm:$0xff]
  %v32 = vld [vmem:[%s0 + $0xc0] sm:$0xff]
  %v33 = vld [vmem:[%s0 + $0xc8] sm:$0xff]
  %v34 = vld [vmem:[%s0 + $0xd0] sm:$0xff]
  %v35 = vld [vmem:[%s0 + $0xd8] sm:$0xff]
  %v36 = vld [vmem:[%s0 + $0xe0] sm:$0xff]
  %v37 = vld [vmem:[%s0 + $0xe8] sm:$0xff]
  %v38 = vld [vmem:[%s0 + $0xf0] sm:$0xff]
  %v39 = vld [vmem:[%s0 + $0xf8] sm:$0xff]
  %v40 = vld [vmem:[%s0 + $0x100] sm:$0xff]
  %v41 = vld [vmem:[%s0 + $0x108] sm:$0xff]
  %v42 = vld [vmem:[%s0 + $0x110] sm:$0xff]
  %v43 = vld [vmem:[%s0 + $0x118] sm:$0xff]
  %v44 = vld [vmem:[%s0 + $0x120] sm:$0xff]
  %v45 = vld [vmem:[%s0 + $0x128] sm:$0xff]
  %v46 = vld [vmem:[%s0 + $0x130] sm:$0xff]
  %v47 = vld [vmem:[%s0 + $0x138] sm:$0xff]
  %v48 = vld [vmem:[%s0 + $0x140] sm:$0xff]
  %v49 = vld [vmem:[%s0 + $0x148] sm:$0xff]
  %v50 = vld [vmem:[%s0 + $0x150] sm:$0xff]
  %v51 = vld [vmem:[%s0 + $0x158] sm:$0xff]
  %v52 = vld [vmem:[%s0 + $0x160] sm:$0xff]
  %v53 = vld [vmem:[%s0 + $0x168] sm:$0xff]
  %v54 = vld [vmem:[%s0 + $0x170] sm:$0xff]
  %v55 = vld [vmem:[%s0 + $0x178] sm:$0xff]
  %v56 = vld [vmem:[%s0 + $0x180] sm:$0xff]
  %v57 = vld [vmem:[%s0 + $0x188] sm:$0xff]
  %v58 = vld [vmem:[%s0 + $0x190] sm:$0xff]
  %v59 = vld [vmem:[%s0 + $0x198] sm:$0xff]
  %v60 = vld [vmem:[%s0 + $0x1a0] sm:$0xff]
  %v61 = vld [vmem:[%s0 + $0x1a8] sm:$0xff]
  %v62 = vld [vmem:[%s0 + $0x1b0] sm:$0xff]
  %v63 = vld [vmem:[%s0 + $0x1b8] sm:$0x1]
  %v64 = vmax.f32 %v8, 0.0
  %v65 = vmax.f32 %v9, 0.0
  %v66 = vmax.f32 %v10, 0.0
  %v67 = vmax.f32 %v11, 0.0
  %v68 = vmax.f32 %v12, 0.0
  %v69 = vmax.f32 %v13, 0.0
  %v70 = vmax.f32 %v14, 0.0
  %v71 = vmax.f32 %v15, 0.0
  %v72 = vmax.f32 %v16, 0.0
  %v73 = vmax.f32 %v17, 0.0
  %v74 = vmax.f32 %v18, 0.0
  %v75 = vmax.f32 %v19, 0.0
  %v76 = vmax.f32 %v20, 0.0
  %v77 = vmax.f32 %v21, 0.0
  %v78 = vmax.f32 %v22, 0.0
  %v79 = vmax.f32 %v23, 0.0
  %v80 = vmax.f32 %v24, 0.0
  %v81 = vmax.f32 %v25, 0.0
  %v82 = vmax.f32 %v26, 0.0
  %v83 = vmax.f32 %v27, 0.0
  %v84 = vmax.f32 %v28, 0.0
  %v85 = vmax.f32 %v29, 0.0
  %v86 = vmax.f32 %v30, 0.0
  %v87 = vmax.f32 %v31, 0.0
  %v88 = vmax.f32 %v32, 0.0
  %v89 = vmax.f32 %v33, 0.0
  %v90 = vmax.f32 %v34, 0.0
  %v91 = vmax.f32 %v35, 0.0
  %v92 = vmax.f32 %v36, 0.0
  %v93 = vmax.f32 %v37, 0.0
  %v94 = vmax.f32 %v38, 0.0
  %v95 = vmax.f32 %v39, 0.0
  %v96 = vmax.f32 %v40, 0.0
  %v97 = vmax.f32 %v41, 0.0
  %v98 = vmax.f32 %v42, 0.0
  %v99 = vmax.f32 %v43, 0.0
  %v100 = vmax.f32 %v44, 0.0
  %v101 = vmax.f32 %v45, 0.0
  %v102 = vmax.f32 %v46, 0.0
  %v103 = vmax.f32 %v47, 0.0
  %v104 = vmax.f32 %v48, 0.0
  %v105 = vmax.f32 %v49, 0.0
  %v106 = vmax.f32 %v50, 0.0
  %v107 = vmax.f32 %v51, 0.0
  %v108 = vmax.f32 %v52, 0.0
  %v109 = vmax.f32 %v53, 0.0
  %v110 = vmax.f32 %v54, 0.0
  %v111 = vmax.f32 %v55, 0.0
  %v112 = vmax.f32 %v56, 0.0
  %v113 = vmax.f32 %v57, 0.0
  %v114 = vmax.f32 %v58, 0.0
  %v115 = vmax.f32 %v59, 0.0
  %v116 = vmax.f32 %v60, 0.0
  %v117 = vmax.f32 %v61, 0.0
  %v118 = vmax.f32 %v62, 0.0
  %v119 = vmax.f32 %v63, 0.0
  %120 = vst [vmem:[%s1] sm:$0xff] %v64
  %121 = vst [vmem:[%s1 + $0x8] sm:$0xff] %v65
  %122 = vst [vmem:[%s1 + $0x10] sm:$0xff] %v66
  %123 = vst [vmem:[%s1 + $0x18] sm:$0xff] %v67
  %124 = vst [vmem:[%s1 + $0x20] sm:$0xff] %v68
  %125 = vst [vmem:[%s1 + $0x28] sm:$0xff] %v69
  %126 = vst [vmem:[%s1 + $0x30] sm:$0xff] %v70
  %127 = vst [vmem:[%s1 + $0x38] sm:$0xff] %v71
  %128 = vst [vmem:[%s1 + $0x40] sm:$0xff] %v72
  %129 = vst [vmem:[%s1 + $0x48] sm:$0xff] %v73
  %130 = vst [vmem:[%s1 + $0x50] sm:$0xff] %v74
  %131 = vst [vmem:[%s1 + $0x58] sm:$0xff] %v75
  %132 = vst [vmem:[%s1 + $0x60] sm:$0xff] %v76
  %133 = vst [vmem:[%s1 + $0x68] sm:$0xff] %v77
  %134 = vst [vmem:[%s1 + $0x70] sm:$0xff] %v78
  %135 = vst [vmem:[%s1 + $0x78] sm:$0xff] %v79
  %136 = vst [vmem:[%s1 + $0x80] sm:$0xff] %v80
  %137 = vst [vmem:[%s1 + $0x88] sm:$0xff] %v81
  %138 = vst [vmem:[%s1 + $0x90] sm:$0xff] %v82
  %139 = vst [vmem:[%s1 + $0x98] sm:$0xff] %v83
  %140 = vst [vmem:[%s1 + $0xa0] sm:$0xff] %v84
  %141 = vst [vmem:[%s1 + $0xa8] sm:$0xff] %v85
  %142 = vst [vmem:[%s1 + $0xb0] sm:$0xff] %v86
  %143 = vst [vmem:[%s1 + $0xb8] sm:$0xff] %v87
  %144 = vst [vmem:[%s1 + $0xc0] sm:$0xff] %v88
  %145 = vst [vmem:[%s1 + $0xc8] sm:$0xff] %v89
  %146 = vst [vmem:[%s1 + $0xd0] sm:$0xff] %v90
  %147 = vst [vmem:[%s1 + $0xd8] sm:$0xff] %v91
  %148 = vst [vmem:[%s1 + $0xe0] sm:$0xff] %v92
  %149 = vst [vmem:[%s1 + $0xe8] sm:$0xff] %v93
  %150 = vst [vmem:[%s1 + $0xf0] sm:$0xff] %v94
  %151 = vst [vmem:[%s1 + $0xf8] sm:$0xff] %v95
  %152 = vst [vmem:[%s1 + $0x100] sm:$0xff] %v96
  %153 = vst [vmem:[%s1 + $0x108] sm:$0xff] %v97
  %154 = vst [vmem:[%s1 + $0x110] sm:$0xff] %v98
  %155 = vst [vmem:[%s1 + $0x118] sm:$0xff] %v99
  %156 = vst [vmem:[%s1 + $0x120] sm:$0xff] %v100
  %157 = vst [vmem:[%s1 + $0x128] sm:$0xff] %v101
  %158 = vst [vmem:[%s1 + $0x130] sm:$0xff] %v102
  %159 = vst [vmem:[%s1 + $0x138] sm:$0xff] %v103
  %160 = vst [vmem:[%s1 + $0x140] sm:$0xff] %v104
  %161 = vst [vmem:[%s1 + $0x148] sm:$0xff] %v105
  %162 = vst [vmem:[%s1 + $0x150] sm:$0xff] %v106
  %163 = vst [vmem:[%s1 + $0x158] sm:$0xff] %v107
  %164 = vst [vmem:[%s1 + $0x160] sm:$0xff] %v108
  %165 = vst [vmem:[%s1 + $0x168] sm:$0xff] %v109
  %166 = vst [vmem:[%s1 + $0x170] sm:$0xff] %v110
  %167 = vst [vmem:[%s1 + $0x178] sm:$0xff] %v111
  %168 = vst [vmem:[%s1 + $0x180] sm:$0xff] %v112
  %169 = vst [vmem:[%s1 + $0x188] sm:$0xff] %v113
  %170 = vst [vmem:[%s1 + $0x190] sm:$0xff] %v114
  %171 = vst [vmem:[%s1 + $0x198] sm:$0xff] %v115
  %172 = vst [vmem:[%s1 + $0x1a0] sm:$0xff] %v116
  %173 = vst [vmem:[%s1 + $0x1a8] sm:$0xff] %v117
  %174 = vst [vmem:[%s1 + $0x1b0] sm:$0xff] %v118
  %175 = vst [vmem:[%s1 + $0x1b8] sm:$0x1] %v119
  // Predicated region
  $region6: #{relu_pallas.1} parent=0 // pred_check
    _
  $region7: #{relu_pallas.1} parent=0 // pred_check_branch
    %177 = sbr.rel (0) target = $region9
  $region8: #{relu_pallas.1} parent=0 // pred_region
    _
  $region9: #{relu_pallas.1} parent=0 // pred_fallthru
    _
  // Predicated region
  $region10: #{relu_pallas.1} parent=0 // pred_check
    _
  $region11: #{relu_pallas.1} parent=0 // pred_check_branch
    %179 = sbr.rel (0) target = $region13
  $region12: #{relu_pallas.1} parent=0 // pred_region
    _
  $region13: #{relu_pallas.1} parent=0 // pred_fallthru
    _

</llo_original>
